<compile_context>
chip_gen: v7x
topology: tpu7x:2x2x1
jax: 0.10.0
libtpu: 0.0.40
codegen_flags: <defaults>
</compile_context>

<pallas_src>
import jax
import jax.numpy as jnp
from jax.experimental import pallas as pl
from jax.experimental.pallas import tpu as pltpu


def _scale_kernel(w_ref, x_ref, o_ref):
    # w_ref: (1,) f32 weight in SMEM (scalar-prefetch, loaded once before grid)
    # x_ref / o_ref: (tr, c) lane-dense VMEM tiles
    o_ref[...] = (x_ref[...] * w_ref[0]).astype(o_ref.dtype)


def _round_up(a, b):
    return ((a + b - 1) // b) * b


def example_linear_forward(x, weight, *, lane_c=2048, tile_bytes=4 << 20,
                           min_grid_steps=4):
    """Compute weight * x (scalar broadcast), matching ExampleLinear.forward."""
    orig_shape = x.shape
    n = int(x.size)
    w_scalar = jnp.asarray(weight, jnp.float32).reshape(())
    # torch type promotion: f32 Parameter * x -> promote(x.dtype, f32)
    out_dtype = jnp.promote_types(x.dtype, jnp.float32)

    if n == 0:
        return x.astype(out_dtype)

    # Tiny-input bypass: launch + tiling overhead would dominate below one
    # (8,128) vreg worth of data.
    if n < 8 * 128:
        return (x * w_scalar).astype(out_dtype)

    # Lane width: largest multiple of 128 <= lane_c dividing n exactly, so the
    # 2-D view is a zero-copy reshape (no pad, no trailing slice).
    c = 0
    cand = lane_c
    while cand >= 128:
        if n % cand == 0:
            c = cand
            break
        cand //= 2
    if c == 0:
        # n not a multiple of 128: a pad+kernel+slice path would move ~3x the
        # bytes of this single XLA elementwise pass, so do the latter.
        # TODO(synk): in-kernel ragged-tail handling instead of this fallback.
        return (x * w_scalar).astype(out_dtype)

    rows = n // c
    itemsize = jnp.dtype(x.dtype).itemsize
    sublane = max(8, 32 // itemsize)          # 8 f32 / 16 bf16 / 32 int8,fp8

    # Row tile: ~tile_bytes per input buffer, a multiple of the sublane pack,
    # capped so the grid keeps >= min_grid_steps steps when the input is big
    # enough (the "parallel" axis is what shards work across v7x's 2 TCs).
    target_tr = max(sublane, (tile_bytes // (c * itemsize)) // sublane * sublane)
    if rows >= min_grid_steps * sublane:
        target_tr = min(target_tr,
                        _round_up(pl.cdiv(rows, min_grid_steps), sublane))
    tr = min(target_tr, rows)                 # tr == rows (full dim) is legal
    grid = (pl.cdiv(rows, tr),)               # ragged last block: Pallas masks it

    x2d = x.reshape(rows, c)                  # zero-copy view
    w1d = w_scalar.reshape(1)

    out2d = pl.pallas_call(
        _scale_kernel,
        out_shape=jax.ShapeDtypeStruct((rows, c), out_dtype),
        grid_spec=pltpu.PrefetchScalarGridSpec(
            num_scalar_prefetch=1,            # weight -> SMEM, read once
            grid=grid,
            in_specs=[pl.BlockSpec((tr, c), lambda i, w: (i, 0))],
            out_specs=pl.BlockSpec((tr, c), lambda i, w: (i, 0)),
        ),
        compiler_params=pltpu.CompilerParams(
            dimension_semantics=("parallel",),
            # Explicit ceiling so ~4 MiB tiles (2x double-buffered in+out =
            # 16 MiB) are safe even under v5e's 16 MiB default scoped VMEM,
            # while staying well inside v7x's 64 MiB physical VMEM.
            vmem_limit_bytes=48 * 1024 * 1024,
        ),
        cost_estimate=pl.CostEstimate(
            flops=n,
            transcendentals=0,
            bytes_accessed=n * itemsize + n * jnp.dtype(out_dtype).itemsize,
        ),
    )(w1d, x2d)

    return out2d.reshape(orig_shape)


if __name__ == "__main__":
    key = jax.random.PRNGKey(0)
    # Deterministic parameter init, matching torch.Tensor([1]).float()
    weight = jnp.ones((1,), dtype=jnp.float32)

    # Small 4-D input (batch=2, channels=4, 16x16 spatial): 2048 elements,
    # a multiple of 128, so it takes the zero-copy Pallas path.
    x = jax.random.normal(key, (2, 4, 16, 16), dtype=jnp.float32)

    y = jax.block_until_ready(example_linear_forward(x, weight))

    ref = weight[0] * x
    assert y.shape == x.shape and y.dtype == ref.dtype
    assert jnp.allclose(y, ref, atol=0.0, rtol=0.0)

    print("KERNEL_OK")
</pallas_src>

<mosaic_0001>
module attributes {stable_mosaic.version = 11 : i64} {
  func.func @_scale_kernel(%arg0: i32, %arg1: memref<1xf32, #tpu.memory_space<smem>>, %arg2: memref<1x2048xf32, #tpu.memory_space<vmem>>, %arg3: memref<1x2048xf32, #tpu.memory_space<vmem>>) attributes {dimension_semantics = [#tpu.dimension_semantics<parallel>], iteration_bounds = array<i64: 1>, scalar_prefetch = 1 : i64, scratch_operands = 0 : i64, tpu.core_type = #tpu.core_type<tc>, window_params = [{transform_indices = @transform_0, window_bounds = array<i64: 1, 2048>}, {transform_indices = @transform_1, window_bounds = array<i64: 1, 2048>}]} {
    %c0 = arith.constant 0 : index
    %c0_0 = arith.constant 0 : index
    %0 = vector.load %arg2[%c0, %c0_0] : memref<1x2048xf32, #tpu.memory_space<vmem>>, vector<1x2048xf32>
    %c0_1 = arith.constant 0 : index
    %1 = memref.load %arg1[%c0_1] : memref<1xf32, #tpu.memory_space<smem>>
    %2 = vector.broadcast %1 : f32 to vector<1x2048xf32>
    %3 = arith.mulf %0, %2 : vector<1x2048xf32>
    %c0_2 = arith.constant 0 : index
    %c0_3 = arith.constant 0 : index
    %4 = vector.load %arg3[%c0_2, %c0_3] : memref<1x2048xf32, #tpu.memory_space<vmem>>, vector<1x2048xf32>
    tpu.vector_store %arg3[%c0_2, %c0_3], %3 {strides = array<i32>} : memref<1x2048xf32, #tpu.memory_space<vmem>>, vector<1x2048xf32>,
    return
  }
  func.func @transform_0(%arg0: i32, %arg1: memref<1xf32, #tpu.memory_space<smem>>) -> (i32, i32) {
    %c0_i32 = arith.constant 0 : i32
    %c0_i32_0 = arith.constant 0 : i32
    return %arg0, %c0_i32 : i32, i32
  }
  func.func @transform_1(%arg0: i32, %arg1: memref<1xf32, #tpu.memory_space<smem>>) -> (i32, i32) {
    %c0_i32 = arith.constant 0 : i32
    %c0_i32_0 = arith.constant 0 : i32
    return %arg0, %c0_i32 : i32, i32
  }
}

</mosaic_0001>

<llo_original>
// kernel: tpu_custom_call.1
$region0: #{tpu_custom_call.1}
  #allocation0 [shape = 'u32[]', space=smem, size = 0x4, offset = 0x4, fixed_abs, tag = 'smem constant byte address 0x4 - core index']
  #allocation1 [shape = 'u32[144,128]{1,0:T(1,128)}', space=vmem, size = 0x12000, scoped, tag = 'internal scratch']
  #allocation2 [shape = 's32[1]{0}', space=sflag, size = 0x4, scoped, tag = 'scoped memory for tpu_custom_call.1']
  #allocation3 [shape = 'f32[1]{0:T(128)S(6)}', space=smem, size = 0x200, scoped, tag = 'prefetched SMEM operand 0']
  %s0 = inlined_call_operand.<no memory space> [shape: f32[1], index: 0, kind: input, shape index: {}]
  %s1 = inlined_call_operand.hbm [shape: f32[1,2048], index: 1, kind: input, shape index: {}]
  %s2 = inlined_call_operand.hbm [shape: f32[1,2048], index: 2, kind: output, shape index: {}]
  %s3 = sld [smem:[#allocation0]]
  $region18: #{tpu_custom_call.1} parent=0
    _
  %s5 = ssub.s32 1, %s3
  %s6 = scalar_select 0, %s5, %s3
  %7 = sst [smem:[#allocation3]] %s0
  $region1: #{tpu_custom_call.1} parent=0
    #allocation4 [shape = 'u8[8192]{0}', space=vmem, size = 0x2000, scoped, tag = 'input window, operand 1, single buffered']
    #allocation5 [shape = 's32[1]{0}', space=sflag, size = 0x4, scoped, tag = 'scoped memory for tpu_custom_call.1']
    #allocation6 [shape = 's32[1]{0}', space=sflag, size = 0x4, scoped, tag = 'scoped memory for tpu_custom_call.1']
    #allocation7 [shape = 'u8[8192]{0}', space=vmem, size = 0x2000, scoped, tag = 'output window, operand 0, single buffered']
    %8 = vsyncpa [#allocation5], 0
    %9 = vsyncpa [#allocation6], 0
    // Predicated region
    $region2: #{tpu_custom_call.1} parent=1 // pred_check
      _
    $region3: #{tpu_custom_call.1} parent=1 // pred_check_branch
      %11 = sbr.rel (0) target = $region5
    $region4: #{tpu_custom_call.1} parent=1 // pred_region
      %s13 = ssub.s32 256, 256
      %14 = vsyncadd [#allocation5], %s13
      %s16 = sshll.u32 [#allocation4], 4
      %s17 = int_to_ptr.vmem [resolvable:$true] %s16
      %19 = dma.hbm_to_vmem [thread:$0]  %s1, 256, %s17, [#allocation5]
    $region5: #{tpu_custom_call.1} parent=1 // pred_fallthru
      _
    // Predicated region
    $region6: #{tpu_custom_call.1} parent=1 // pred_check
      _
    $region7: #{tpu_custom_call.1} parent=1 // pred_check_branch
      %21 = sbr.rel (0) target = $region9
    $region8: #{tpu_custom_call.1} parent=1 // pred_region
      %22 = dma.done [#allocation5], 256
    $region9: #{tpu_custom_call.1} parent=1 // pred_fallthru
      _
    %v23 = vld [vmem:[#allocation4] sm:$0xff]
    %v24 = vld [vmem:[#allocation4 + $0x8] sm:$0xff]
    %s25 = sld [smem:[#allocation3]]
    %v26 = vstv %s25
    %v27 = vmul.f32 %v23, %v26
    %v28 = vmul.f32 %v24, %v26
    %29 = vst [vmem:[#allocation7] sm:$0xff] %v27
    %30 = vst [vmem:[#allocation7 + $0x8] sm:$0xff] %v28
    // Predicated region
    $region10: #{tpu_custom_call.1} parent=1 // pred_check
      _
    $region11: #{tpu_custom_call.1} parent=1 // pred_check_branch
      %32 = sbr.rel (0) target = $region13
    $region12: #{tpu_custom_call.1} parent=1 // pred_region
      %s34 = ssub.s32 256, 256
      %35 = vsyncadd [#allocation6], %s34
      %s37 = sshll.u32 [#allocation7], 4
      %s38 = int_to_ptr.vmem [resolvable:$true] %s37
      %40 = dma.vmem_to_hbm [thread:$0]  %s38, 256, %s2, [#allocation6]
    $region13: #{tpu_custom_call.1} parent=1 // pred_fallthru
      _
    // Predicated region
    $region14: #{tpu_custom_call.1} parent=1 // pred_check
      _
    $region15: #{tpu_custom_call.1} parent=1 // pred_check_branch
      %42 = sbr.rel (0) target = $region17
    $region16: #{tpu_custom_call.1} parent=1 // pred_region
      %43 = dma.done [#allocation6], 256
    $region17: #{tpu_custom_call.1} parent=1 // pred_fallthru
      _
    %44 = vsyncpa [#allocation5], 1
    %45 = vsyncpa [#allocation6], 1

</llo_original>
